<compile_context>
chip_gen: v6e
topology: v6e:2x2x1
jax: 0.10.0
libtpu: 0.0.40
codegen_flags: <defaults>
</compile_context>

<pallas_src>
import math

import jax
import jax.numpy as jnp
import numpy as np
from jax.experimental import pallas as pl
from jax.experimental.pallas import tpu as pltpu

_LANE = 128


def _build_pe_table(embedding_dim: int, max_length: int = 5000,
                    dtype=jnp.float32) -> jnp.ndarray:
    """Sinusoidal positional encoding table, shape (max_length, embedding_dim)."""
    position = jnp.arange(max_length, dtype=jnp.float32)[:, None]            # (L, 1)
    div_term = jnp.exp(
        -jnp.arange(0, embedding_dim, 2, dtype=jnp.float32)
        / embedding_dim
        * np.log(10000.0)
    )                                                                        # (ceil(D/2),)
    angles = position * div_term                                             # (L, ceil(D/2))
    pe = jnp.zeros((max_length, embedding_dim), dtype=jnp.float32)
    pe = pe.at[:, 0::2].set(jnp.sin(angles))
    # Guard against odd embedding_dim (cos part has floor(D/2) columns).
    pe = pe.at[:, 1::2].set(jnp.cos(angles)[:, : embedding_dim // 2])
    return pe.astype(dtype)


def _add_pe_kernel(x_ref, pe_ref, o_ref):
    # x_ref / o_ref: (TB, TS, D2); pe_ref: (TS, D2).
    # Broadcast over the leading (batch) dim is free on the VPU (lane/sublane
    # layout of each (TS, D2) slab is unchanged).
    o_ref[...] = x_ref[...] + pe_ref[...][None, :, :]


def _tpu_memory_params():
    """Returns (tile_budget_bytes, vmem_limit_bytes, target_tile_bytes)."""
    try:
        cap = int(pltpu.get_tpu_info().vmem_capacity_bytes)
    except Exception:
        cap = 64 * 1024 * 1024  # conservative fallback: v7x-class per-TC VMEM
    if cap <= 64 * 1024 * 1024:
        # v7x-class: small VMEM but ~3.2 TB/s HBM -> per-step bytes matter most.
        target_tile_bytes = 6 * 1024 * 1024
    else:
        # v5e / v6e: 128 MiB VMEM, slower HBM -> 4 MiB tiles already hit roofline.
        target_tile_bytes = 4 * 1024 * 1024
    tile_budget = (cap * 5) // 8   # all pipelined operand tiles must fit here
    vmem_limit = (cap * 3) // 4    # scoped-VMEM limit handed to Mosaic (headroom)
    return tile_budget, vmem_limit, target_tile_bytes


def positional_encoding_forward(x: jnp.ndarray, pe_table: jnp.ndarray) -> jnp.ndarray:
    """x: (B, S, D); pe_table: (max_length, D). Returns x + pe[:S]."""
    B, S, D = x.shape
    max_length, D_pe = pe_table.shape
    if D_pe != D:
        raise ValueError(f"embedding_dim mismatch: x has {D}, pe_table has {D_pe}")
    if S > max_length:
        raise ValueError(f"seq_len {S} exceeds positional-encoding max_length {max_length}")

    # Match PyTorch promotion semantics of `x + self.pe` (pe is an f32 buffer).
    out_dtype = jnp.promote_types(x.dtype, pe_table.dtype)
    x = x.astype(out_dtype)
    pe = pe_table[:S, :].astype(out_dtype)                                   # (S, D)

    itemsize = jnp.dtype(out_dtype).itemsize
    pack = 8 * max(1, 4 // itemsize)   # sublane rows per vreg: 8 f32, 16 bf16, 32 int8

    # ---- Lane-dense folding: make the last dim a multiple of 128 so stores are
    # unmasked vst (not vst.msk). If S isn't divisible by the fold factor, pad S
    # (cheap relative to the masked-store penalty) and slice the output back.
    fold = 1
    S_pad = S
    if D % _LANE != 0:
        r = _LANE // math.gcd(D, _LANE)
        s_padded = ((S + r - 1) // r) * r
        if s_padded <= 4 * S:
            fold = r
            S_pad = s_padded
            if S_pad != S:
                x = jnp.pad(x, ((0, 0), (0, S_pad - S), (0, 0)))
                pe = jnp.pad(pe, ((0, S_pad - S), (0, 0)))
        # else: degenerate tiny-S case; folding would blow up traffic — accept
        # masked stores (block last dim equals the full dim, still legal).

    S2, D2 = S_pad // fold, D * fold
    x2 = x.reshape(B, S2, D2)          # free row-major reshape
    pe2 = pe.reshape(S2, D2)
    row_bytes = D2 * itemsize

    tile_budget, vmem_limit, target_tile_bytes = _tpu_memory_params()

    # ---- Sequence tile: bytes-based target, clamped so 6 pipelined tiles
    # (double-buffered x, out, PE) stay within the generation-aware VMEM budget.
    max_rows = max(pack, tile_budget // (6 * row_bytes))
    ts_target = max(pack, target_tile_bytes // row_bytes)
    TS = min(S2, ts_target, max_rows)
    if TS < S2:
        TS = max(pack, (TS // pack) * pack)  # sublane-pack-aligned partial tile
    if TS >= S2:
        TS = S2                              # full extent is always legal
    num_s_tiles = pl.cdiv(S2, TS)

    # ---- v7x has 2 TensorCores: for single-batch inputs make sure a parallel
    # grid axis has >= 2 blocks so both cores stream.
    if B == 1 and num_s_tiles == 1 and S2 >= 2 * pack:
        TS = max(pack, ((S2 // 2) // pack) * pack)
        num_s_tiles = pl.cdiv(S2, TS)

    # ---- Batch blocking: when the whole sequence is a single small tile,
    # process TB batches per grid step to amortize the ~0.35 us/step overhead.
    TB = 1
    if num_s_tiles == 1:
        tile_bytes = max(1, TS * row_bytes)
        want = max(1, target_tile_bytes // tile_bytes)
        vmem_cap_tb = max(1, (tile_budget - 2 * tile_bytes) // (4 * tile_bytes))
        TB = int(min(B, want, vmem_cap_tb))
        while B % TB != 0:    # keep blocks evenly dividing the batch
            TB -= 1
    num_b_tiles = pl.cdiv(B, TB)

    cost = pl.CostEstimate(
        flops=B * S2 * D2,
        transcendentals=0,
        # x read + out write once; PE read once per S-tile (resident across the
        # inner batch axis).
        bytes_accessed=(2 * B * S2 * D2 + S2 * D2) * itemsize,
    )

    out2 = pl.pallas_call(
        _add_pe_kernel,
        out_shape=jax.ShapeDtypeStruct((B, S2, D2), out_dtype),
        grid_spec=pltpu.PrefetchScalarGridSpec(
            num_scalar_prefetch=0,
            # S-tile axis OUTER, batch axis inner: the PE tile's block index is
            # constant across consecutive batch steps -> stays resident in VMEM.
            grid=(num_s_tiles, num_b_tiles),
            in_specs=[
                pl.BlockSpec((TB, TS, D2), lambda s, b: (b, s, 0)),   # x tile
                pl.BlockSpec((TS, D2), lambda s, b: (s, 0)),          # shared PE tile
            ],
            out_specs=pl.BlockSpec((TB, TS, D2), lambda s, b: (b, s, 0)),
        ),
        compiler_params=pltpu.CompilerParams(
            dimension_semantics=("parallel", "parallel"),
            vmem_limit_bytes=int(vmem_limit),
        ),
        cost_estimate=cost,
    )(x2, pe2)

    out = out2.reshape(B, S_pad, D)
    if S_pad != S:
        out = out[:, :S, :]
    return out


if __name__ == "__main__":
    key = jax.random.PRNGKey(0)

    # Small shapes consistent with the module: (batch, seq_len, embedding_dim).
    batch, seq_len, embedding_dim = 2, 8, 32
    max_length = 64  # module default is 5000; small deterministic table for the demo

    pe_table = _build_pe_table(embedding_dim, max_length)
    x = jax.random.normal(key, (batch, seq_len, embedding_dim), dtype=jnp.float32)
    out = jax.block_until_ready(positional_encoding_forward(x, pe_table))
    ref = x + pe_table[None, :seq_len, :]
    np.testing.assert_allclose(np.asarray(out), np.asarray(ref), atol=1e-6, rtol=1e-6)

    # No-fold path (D a multiple of 128).
    pe_table2 = _build_pe_table(256, 32)
    x2 = jax.random.normal(jax.random.PRNGKey(1), (2, 16, 256), dtype=jnp.float32)
    out2 = jax.block_until_ready(positional_encoding_forward(x2, pe_table2))
    ref2 = x2 + pe_table2[None, :16, :]
    np.testing.assert_allclose(np.asarray(out2), np.asarray(ref2), atol=1e-6, rtol=1e-6)

    # Pad-then-fold path (D % 128 != 0 and S not divisible by the fold factor).
    pe_table3 = _build_pe_table(32, 32)
    x3 = jax.random.normal(jax.random.PRNGKey(2), (2, 9, 32), dtype=jnp.float32)
    out3 = jax.block_until_ready(positional_encoding_forward(x3, pe_table3))
    ref3 = x3 + pe_table3[None, :9, :]
    np.testing.assert_allclose(np.asarray(out3), np.asarray(ref3), atol=1e-6, rtol=1e-6)

    print("KERNEL_OK")
</pallas_src>

<mosaic_0001>
module attributes {stable_mosaic.version = 11 : i64} {
  func.func @_add_pe_kernel(%arg0: i32, %arg1: i32, %arg2: memref<2x2x128xf32, #tpu.memory_space<vmem>>, %arg3: memref<2x128xf32, #tpu.memory_space<vmem>>, %arg4: memref<2x2x128xf32, #tpu.memory_space<vmem>>) attributes {dimension_semantics = [#tpu.dimension_semantics<parallel>, #tpu.dimension_semantics<parallel>], iteration_bounds = array<i64: 1, 1>, scalar_prefetch = 0 : i64, scratch_operands = 0 : i64, tpu.core_type = #tpu.core_type<tc>, window_params = [{transform_indices = @transform_0, window_bounds = array<i64: 2, 2, 128>}, {transform_indices = @transform_1, window_bounds = array<i64: 2, 128>}, {transform_indices = @transform_2, window_bounds = array<i64: 2, 2, 128>}]} {
    %c0 = arith.constant 0 : index
    %c0_0 = arith.constant 0 : index
    %c0_1 = arith.constant 0 : index
    %0 = vector.load %arg2[%c0, %c0_0, %c0_1] : memref<2x2x128xf32, #tpu.memory_space<vmem>>, vector<2x2x128xf32>
    %c0_2 = arith.constant 0 : index
    %c0_3 = arith.constant 0 : index
    %1 = vector.load %arg3[%c0_2, %c0_3] : memref<2x128xf32, #tpu.memory_space<vmem>>, vector<2x128xf32>
    %2 = vector.shape_cast %1 : vector<2x128xf32> to vector<1x2x128xf32>
    %3 = vector.broadcast %2 : vector<1x2x128xf32> to vector<2x2x128xf32>
    %4 = arith.addf %0, %3 : vector<2x2x128xf32>
    %c0_4 = arith.constant 0 : index
    %c0_5 = arith.constant 0 : index
    %c0_6 = arith.constant 0 : index
    %5 = vector.load %arg4[%c0_4, %c0_5, %c0_6] : memref<2x2x128xf32, #tpu.memory_space<vmem>>, vector<2x2x128xf32>
    tpu.vector_store %arg4[%c0_4, %c0_5, %c0_6], %4 {strides = array<i32>} : memref<2x2x128xf32, #tpu.memory_space<vmem>>, vector<2x2x128xf32>,
    return
  }
  func.func @transform_0(%arg0: i32, %arg1: i32) -> (i32, i32, i32) {
    %c0_i32 = arith.constant 0 : i32
    %c0_i32_0 = arith.constant 0 : i32
    return %arg1, %arg0, %c0_i32 : i32, i32, i32
  }
  func.func @transform_1(%arg0: i32, %arg1: i32) -> (i32, i32) {
    %c0_i32 = arith.constant 0 : i32
    %c0_i32_0 = arith.constant 0 : i32
    return %arg0, %c0_i32 : i32, i32
  }
  func.func @transform_2(%arg0: i32, %arg1: i32) -> (i32, i32, i32) {
    %c0_i32 = arith.constant 0 : i32
    %c0_i32_0 = arith.constant 0 : i32
    return %arg1, %arg0, %c0_i32 : i32, i32, i32
  }
}

</mosaic_0001>

<llo_original>
// kernel: tpu_custom_call.1
$region0: #{tpu_custom_call.1}
  #allocation0 [shape = 'u32[]', space=smem, size = 0x4, offset = 0x4, fixed_abs, tag = 'smem constant byte address 0x4 - core index']
  #allocation1 [shape = 'u32[144,128]{1,0:T(1,128)}', space=vmem, size = 0x12000, scoped, tag = 'internal scratch']
  %s0 = inlined_call_operand.hbm [shape: f32[2,2,128], index: 0, kind: input, shape index: {}]
  %s1 = inlined_call_operand.hbm [shape: f32[2,128], index: 1, kind: input, shape index: {}]
  %s2 = inlined_call_operand.hbm [shape: f32[2,2,128], index: 2, kind: output, shape index: {}]
  %s3 = sld [smem:[#allocation0]]
  $region26: #{tpu_custom_call.1} parent=0
    _
  %s5 = ssub.s32 1, %s3
  %s6 = scalar_select 0, %s5, %s3
  $region1: #{tpu_custom_call.1} parent=0
    #allocation2 [shape = 'u8[2048]{0}', space=vmem, size = 0x800, scoped, tag = 'input window, operand 0, single buffered']
    #allocation3 [shape = 's32[1]{0}', space=sflag, size = 0x4, scoped, tag = 'scoped memory for tpu_custom_call.1']
    #allocation4 [shape = 's32[1]{0}', space=sflag, size = 0x4, scoped, tag = 'scoped memory for tpu_custom_call.1']
    #allocation5 [shape = 'u8[1024]{0}', space=vmem, size = 0x400, scoped, tag = 'input window, operand 1, single buffered']
    #allocation6 [shape = 's32[1]{0}', space=sflag, size = 0x4, scoped, tag = 'scoped memory for tpu_custom_call.1']
    #allocation7 [shape = 'u8[2048]{0}', space=vmem, size = 0x800, scoped, tag = 'output window, operand 0, single buffered']
    %7 = vsyncpa [#allocation3], 0
    %8 = vsyncpa [#allocation6], 0
    %9 = vsyncpa [#allocation4], 0
    // Predicated region
    $region2: #{tpu_custom_call.1} parent=1 // pred_check
      _
    $region3: #{tpu_custom_call.1} parent=1 // pred_check_branch
      %11 = sbr.rel (0) target = $region5
    $region4: #{tpu_custom_call.1} parent=1 // pred_region
      %s13 = ssub.s32 64, 64
      %14 = vsyncadd [#allocation3], %s13
      %s15 = sshll.u32 [#allocation2], 4
      %s16 = int_to_ptr.vmem [resolvable:$true] %s15
      %21 = dma.hbm_to_vmem [thread:$0]  %s0, 64, %s16, [#allocation3], 32, 32, 2
    $region5: #{tpu_custom_call.1} parent=1 // pred_fallthru
      _
    // Predicated region
    $region6: #{tpu_custom_call.1} parent=1 // pred_check
      _
    $region7: #{tpu_custom_call.1} parent=1 // pred_check_branch
      %23 = sbr.rel (0) target = $region9
    $region8: #{tpu_custom_call.1} parent=1 // pred_region
      %s25 = ssub.s32 32, 32
      %26 = vsyncadd [#allocation6], %s25
      %s28 = sshll.u32 [#allocation5], 4
      %s29 = int_to_ptr.vmem [resolvable:$true] %s28
      %31 = dma.hbm_to_vmem [thread:$0]  %s1, 32, %s29, [#allocation6]
    $region9: #{tpu_custom_call.1} parent=1 // pred_fallthru
      _
    // Predicated region
    $region10: #{tpu_custom_call.1} parent=1 // pred_check
      _
    $region11: #{tpu_custom_call.1} parent=1 // pred_check_branch
      %33 = sbr.rel (0) target = $region13
    $region12: #{tpu_custom_call.1} parent=1 // pred_region
      %34 = dma.done [#allocation3], 64
    $region13: #{tpu_custom_call.1} parent=1 // pred_fallthru
      _
    // Predicated region
    $region14: #{tpu_custom_call.1} parent=1 // pred_check
      _
    $region15: #{tpu_custom_call.1} parent=1 // pred_check_branch
      %36 = sbr.rel (0) target = $region17
    $region16: #{tpu_custom_call.1} parent=1 // pred_region
      %37 = dma.done [#allocation6], 32
    $region17: #{tpu_custom_call.1} parent=1 // pred_fallthru
      _
    %v38 = vld [vmem:[#allocation2] sm:$0x3]
    %v39 = vld [vmem:[#allocation2 + $0x2] sm:$0x3]
    %v40 = vld [vmem:[#allocation5] sm:$0x3]
    %v41 = vadd.f32 %v38, %v40
    %v42 = vadd.f32 %v39, %v40
    %43 = vst [vmem:[#allocation7] sm:$0x3] %v41
    %44 = vst [vmem:[#allocation7 + $0x2] sm:$0x3] %v42
    // Predicated region
    $region18: #{tpu_custom_call.1} parent=1 // pred_check
      _
    $region19: #{tpu_custom_call.1} parent=1 // pred_check_branch
      %46 = sbr.rel (0) target = $region21
    $region20: #{tpu_custom_call.1} parent=1 // pred_region
      %s48 = ssub.s32 64, 64
      %49 = vsyncadd [#allocation4], %s48
      %s50 = sshll.u32 [#allocation7], 4
      %s51 = int_to_ptr.vmem [resolvable:$true] %s50
      %56 = dma.vmem_to_hbm [thread:$0]  %s51, 64, %s2, [#allocation4], 32, 32, 2
    $region21: #{tpu_custom_call.1} parent=1 // pred_fallthru
      _
    // Predicated region
    $region22: #{tpu_custom_call.1} parent=1 // pred_check
      _
    $region23: #{tpu_custom_call.1} parent=1 // pred_check_branch
      %58 = sbr.rel (0) target = $region25
    $region24: #{tpu_custom_call.1} parent=1 // pred_region
      %59 = dma.done [#allocation4], 64
    $region25: #{tpu_custom_call.1} parent=1 // pred_fallthru
      _
    %60 = vsyncpa [#allocation3], 1
    %61 = vsyncpa [#allocation6], 1
    %62 = vsyncpa [#allocation4], 1

</llo_original>
